<compile_context>
chip_gen: v5e
topology: v5e:2x2
jax: 0.10.0
libtpu: 0.0.40
codegen_flags: <defaults>
</compile_context>

<pallas_src>
import functools

import jax
import jax.numpy as jnp
from jax import lax
from jax.experimental import pallas as pl
from jax.experimental.pallas import tpu as pltpu


def _round_up(x: int, m: int) -> int:
    return ((x + m - 1) // m) * m


def _make_position_encoder_kernel(K: int, D: int, tile_rows: int, chunk_rows: int):
    """Fused Linear(K->D) -> ReLU -> [sum over src/tgt] -> Linear(D->D).

    Per-grid-step ref shapes:
      x_ref : [2K, tile_rows, 128]  f32  VMEM   row p*K+k = feature k of copy p
      w1_ref: [K*D]                 f32  SMEM   (row-major [in, out])
      b1_ref: [D]                   f32  SMEM
      w2_ref: [D*D]                 f32  SMEM   (row-major [in, out])
      b2_ref: [D]                   f32  SMEM
      o_ref : [D, tile_rows, 128]   f32  VMEM   lane/sublane-dense output
    """
    P = 2
    n_chunks = tile_rows // chunk_rows

    def kernel(x_ref, w1_ref, b1_ref, w2_ref, b2_ref, o_ref):
        # Hoist every (tiny) weight / bias scalar read out of all loops.
        w1s = [[w1_ref[k * D + d] for d in range(D)] for k in range(K)]
        b1s = [b1_ref[d] for d in range(D)]
        w2s = [[w2_ref[d * D + e] for e in range(D)] for d in range(D)]
        b2s = [2.0 * b2_ref[e] for e in range(D)]  # bias counted twice: src+tgt summed

        def chunk_body(c, carry):
            off = pl.multiple_of(c * chunk_rows, chunk_rows)

            # Load each feature slab once: dense [chunk_rows, 128] vregs.
            xs = [[x_ref[p * K + k, pl.ds(off, chunk_rows), :].astype(jnp.float32)
                   for k in range(K)] for p in range(P)]

            # ---- Linear(K -> D) + ReLU, reduced over the two src/tgt copies ----
            h = []
            for d in range(D):
                acc = None
                for p in range(P):
                    v = xs[p][0] * w1s[0][d]
                    for k in range(1, K):
                        v = v + xs[p][k] * w1s[k][d]
                    v = jnp.maximum(v + b1s[d], 0.0)
                    acc = v if acc is None else acc + v
                h.append(acc)  # [chunk_rows, 128]

            # ---- Linear(D -> D) on the summed hidden; bias added twice ----
            for e in range(D):
                y = h[0] * w2s[0][e]
                for d in range(1, D):
                    y = y + h[d] * w2s[d][e]
                o_ref[e, pl.ds(off, chunk_rows), :] = (y + b2s[e]).astype(o_ref.dtype)

            return carry

        lax.fori_loop(0, n_chunks, chunk_body, 0)

    return kernel


@functools.partial(jax.jit, static_argnames=("max_tile_rows", "chunk_rows"))
def position_encoder_forward(encodings, w1, b1, w2, b2, *,
                             max_tile_rows: int = 512, chunk_rows: int = 16):
    """encodings: [B, S, 2, K] float -> [B, S, D] float32.

    Matches PositionEncoder.get_trainable_encodings (the device hot path).
    Weights are stored transposed ([in, out]) so y = x @ W + b.
    """
    B, S, P, K = encodings.shape
    assert P == 2, P
    D = w1.shape[-1]
    N = B * S
    R = pl.cdiv(N, 128)                      # 128-lane rows of the flat batch axis

    # --- tile selection (rows of 128 lanes; multiples of 8 sublanes) ---------
    max_tile_rows = max(8, _round_up(max_tile_rows, 8))
    chunk_rows = max(8, _round_up(chunk_rows, 8))

    ts = min(max_tile_rows, _round_up(R, 8))
    if R >= 16:
        # Keep >= 2 grid steps so "parallel" can shard across v7x's two cores.
        ts = min(ts, _round_up(pl.cdiv(R, 2), 8))
    cs = min(chunk_rows, ts)
    if ts % cs:
        cs = 8                               # 8 always divides ts

    R_pad = _round_up(R, ts)
    N_pad = R_pad * 128
    grid = (R_pad // ts,)

    # --- layout plumbing (fused by XLA under jit into one copy pass) ---------
    x = encodings.astype(jnp.float32).reshape(N, P * K)
    if N_pad != N:
        x = jnp.pad(x, ((0, N_pad - N), (0, 0)))
    x = x.T.reshape(P * K, R_pad, 128)       # feature-major, sublane/lane dense

    w1f = w1.astype(jnp.float32).reshape(-1)   # [K*D]
    b1f = b1.astype(jnp.float32).reshape(-1)   # [D]
    w2f = w2.astype(jnp.float32).reshape(-1)   # [D*D]
    b2f = b2.astype(jnp.float32).reshape(-1)   # [D]

    smem_spec = pl.BlockSpec(memory_space=pltpu.MemorySpace.SMEM)

    out_fm = pl.pallas_call(
        _make_position_encoder_kernel(K, D, ts, cs),
        out_shape=jax.ShapeDtypeStruct((D, R_pad, 128), jnp.float32),
        grid=grid,
        in_specs=[
            pl.BlockSpec((P * K, ts, 128), lambda i: (0, i, 0)),  # x tile
            smem_spec,  # w1
            smem_spec,  # b1
            smem_spec,  # w2
            smem_spec,  # b2
        ],
        out_specs=pl.BlockSpec((D, ts, 128), lambda i: (0, i, 0)),
        compiler_params=pltpu.CompilerParams(
            dimension_semantics=("parallel",),
            # Double-buffered footprint is ~10 KiB * ts (<= ~5 MiB at ts=512):
            # comfortably inside the default scoped VMEM on v5e/v6e/v7x.
            vmem_limit_bytes=32 * 1024 * 1024,
        ),
    )(x, w1f, b1f, w2f, b2f)

    # [D, R_pad, 128] -> [B, S, D]  (single fused transpose/copy under jit)
    return out_fm.reshape(D, N_pad)[:, :N].T.reshape(B, S, D)


def reference_forward(encodings, w1, b1, w2, b2):
    """Pure-JAX reference matching the torch module exactly."""
    h = jnp.maximum(
        jnp.einsum("bspk,kd->bspd", encodings.astype(jnp.float32), w1) + b1[0], 0.0)
    y = jnp.einsum("bspd,de->bspe", h, w2) + b2[0]
    return jnp.sum(y, axis=-2)


if __name__ == "__main__":
    # Module hyper-params (small, consistent with the module defaults).
    num_layers = 2          # -> K = num_layers + 1 = 3
    enc_dim = 4             # position_dim
    K = num_layers + 1
    D = enc_dim

    key = jax.random.PRNGKey(0)
    k_enc, k_w1, k_b1, k_w2, k_b2, k_enc2, k_enc3 = jax.random.split(key, 7)

    # nn.Linear params stored transposed as [in, out] so y = x @ W + b.
    w1 = 0.1 * jax.random.normal(k_w1, (K, D), dtype=jnp.float32)
    b1 = 0.1 * jax.random.normal(k_b1, (1, D), dtype=jnp.float32)
    w2 = 0.1 * jax.random.normal(k_w2, (D, D), dtype=jnp.float32)
    b2 = 0.1 * jax.random.normal(k_b2, (1, D), dtype=jnp.float32)

    # Synthetic "encodings" standing in for the host-side dict-lookup output:
    # non-negative hop-count style features of shape [batch, support_n, 2, K].
    # TODO(synk): collect_pos_mapping_ptree / np.unique / nodetime2emb dict
    # lookup is host-side Python glue with no Pallas equivalent; synthesized.
    batch, support_n = 2, 8
    encodings = jnp.abs(
        jax.random.normal(k_enc, (batch, support_n, 2, K), dtype=jnp.float32))

    out = jax.block_until_ready(
        position_encoder_forward(encodings, w1, b1, w2, b2))
    ref = reference_forward(encodings, w1, b1, w2, b2)
    assert out.shape == (batch, support_n, D), out.shape
    assert jnp.allclose(out, ref, atol=1e-5, rtol=1e-5)

    # Ragged N (not a multiple of 128) — exercises the cheap tail pad.
    enc2 = jnp.abs(jax.random.normal(k_enc2, (3, 50, 2, K), dtype=jnp.float32))
    out2 = jax.block_until_ready(
        position_encoder_forward(enc2, w1, b1, w2, b2))
    assert out2.shape == (3, 50, D), out2.shape
    assert jnp.allclose(out2, reference_forward(enc2, w1, b1, w2, b2),
                        atol=1e-5, rtol=1e-5)

    # Larger N: >= 2 grid steps (v7x megacore shardable) and a multi-iteration
    # in-kernel chunk loop over the big VMEM tile.
    enc3 = jnp.abs(jax.random.normal(k_enc3, (4, 600, 2, K), dtype=jnp.float32))
    out3 = jax.block_until_ready(
        position_encoder_forward(enc3, w1, b1, w2, b2,
                                 max_tile_rows=512, chunk_rows=8))
    assert out3.shape == (4, 600, D), out3.shape
    assert jnp.allclose(out3, reference_forward(enc3, w1, b1, w2, b2),
                        atol=1e-5, rtol=1e-5)

    print("KERNEL_OK")
</pallas_src>

<mosaic_0001>
module attributes {stable_mosaic.version = 11 : i64} {
  func.func @kernel(%arg0: i32, %arg1: memref<6x8x128xf32, #tpu.memory_space<vmem>>, %arg2: memref<12xf32, #tpu.memory_space<smem>>, %arg3: memref<4xf32, #tpu.memory_space<smem>>, %arg4: memref<16xf32, #tpu.memory_space<smem>>, %arg5: memref<4xf32, #tpu.memory_space<smem>>, %arg6: memref<4x8x128xf32, #tpu.memory_space<vmem>>) attributes {dimension_semantics = [#tpu.dimension_semantics<parallel>], iteration_bounds = array<i64: 1>, scalar_prefetch = 0 : i64, scratch_operands = 0 : i64, tpu.core_type = #tpu.core_type<tc>, window_params = [{transform_indices = @transform_0, window_bounds = array<i64: 6, 8, 128>}, {transform_indices = @transform_1, window_bounds = array<i64: 12>}, {transform_indices = @transform_2, window_bounds = array<i64: 4>}, {transform_indices = @transform_3, window_bounds = array<i64: 16>}, {transform_indices = @transform_4, window_bounds = array<i64: 4>}, {transform_indices = @transform_5, window_bounds = array<i64: 4, 8, 128>}]} {
    %c0 = arith.constant 0 : index
    %0 = memref.load %arg2[%c0] : memref<12xf32, #tpu.memory_space<smem>>
    %c1 = arith.constant 1 : index
    %1 = memref.load %arg2[%c1] : memref<12xf32, #tpu.memory_space<smem>>
    %c2 = arith.constant 2 : index
    %2 = memref.load %arg2[%c2] : memref<12xf32, #tpu.memory_space<smem>>
    %c3 = arith.constant 3 : index
    %3 = memref.load %arg2[%c3] : memref<12xf32, #tpu.memory_space<smem>>
    %c4 = arith.constant 4 : index
    %4 = memref.load %arg2[%c4] : memref<12xf32, #tpu.memory_space<smem>>
    %c5 = arith.constant 5 : index
    %5 = memref.load %arg2[%c5] : memref<12xf32, #tpu.memory_space<smem>>
    %c6 = arith.constant 6 : index
    %6 = memref.load %arg2[%c6] : memref<12xf32, #tpu.memory_space<smem>>
    %c7 = arith.constant 7 : index
    %7 = memref.load %arg2[%c7] : memref<12xf32, #tpu.memory_space<smem>>
    %c8 = arith.constant 8 : index
    %8 = memref.load %arg2[%c8] : memref<12xf32, #tpu.memory_space<smem>>
    %c9 = arith.constant 9 : index
    %9 = memref.load %arg2[%c9] : memref<12xf32, #tpu.memory_space<smem>>
    %c10 = arith.constant 10 : index
    %10 = memref.load %arg2[%c10] : memref<12xf32, #tpu.memory_space<smem>>
    %c11 = arith.constant 11 : index
    %11 = memref.load %arg2[%c11] : memref<12xf32, #tpu.memory_space<smem>>
    %c0_0 = arith.constant 0 : index
    %12 = memref.load %arg3[%c0_0] : memref<4xf32, #tpu.memory_space<smem>>
    %c1_1 = arith.constant 1 : index
    %13 = memref.load %arg3[%c1_1] : memref<4xf32, #tpu.memory_space<smem>>
    %c2_2 = arith.constant 2 : index
    %14 = memref.load %arg3[%c2_2] : memref<4xf32, #tpu.memory_space<smem>>
    %c3_3 = arith.constant 3 : index
    %15 = memref.load %arg3[%c3_3] : memref<4xf32, #tpu.memory_space<smem>>
    %c0_4 = arith.constant 0 : index
    %16 = memref.load %arg4[%c0_4] : memref<16xf32, #tpu.memory_space<smem>>
    %c1_5 = arith.constant 1 : index
    %17 = memref.load %arg4[%c1_5] : memref<16xf32, #tpu.memory_space<smem>>
    %c2_6 = arith.constant 2 : index
    %18 = memref.load %arg4[%c2_6] : memref<16xf32, #tpu.memory_space<smem>>
    %c3_7 = arith.constant 3 : index
    %19 = memref.load %arg4[%c3_7] : memref<16xf32, #tpu.memory_space<smem>>
    %c4_8 = arith.constant 4 : index
    %20 = memref.load %arg4[%c4_8] : memref<16xf32, #tpu.memory_space<smem>>
    %c5_9 = arith.constant 5 : index
    %21 = memref.load %arg4[%c5_9] : memref<16xf32, #tpu.memory_space<smem>>
    %c6_10 = arith.constant 6 : index
    %22 = memref.load %arg4[%c6_10] : memref<16xf32, #tpu.memory_space<smem>>
    %c7_11 = arith.constant 7 : index
    %23 = memref.load %arg4[%c7_11] : memref<16xf32, #tpu.memory_space<smem>>
    %c8_12 = arith.constant 8 : index
    %24 = memref.load %arg4[%c8_12] : memref<16xf32, #tpu.memory_space<smem>>
    %c9_13 = arith.constant 9 : index
    %25 = memref.load %arg4[%c9_13] : memref<16xf32, #tpu.memory_space<smem>>
    %c10_14 = arith.constant 10 : index
    %26 = memref.load %arg4[%c10_14] : memref<16xf32, #tpu.memory_space<smem>>
    %c11_15 = arith.constant 11 : index
    %27 = memref.load %arg4[%c11_15] : memref<16xf32, #tpu.memory_space<smem>>
    %c12 = arith.constant 12 : index
    %28 = memref.load %arg4[%c12] : memref<16xf32, #tpu.memory_space<smem>>
    %c13 = arith.constant 13 : index
    %29 = memref.load %arg4[%c13] : memref<16xf32, #tpu.memory_space<smem>>
    %c14 = arith.constant 14 : index
    %30 = memref.load %arg4[%c14] : memref<16xf32, #tpu.memory_space<smem>>
    %c15 = arith.constant 15 : index
    %31 = memref.load %arg4[%c15] : memref<16xf32, #tpu.memory_space<smem>>
    %c0_16 = arith.constant 0 : index
    %32 = memref.load %arg5[%c0_16] : memref<4xf32, #tpu.memory_space<smem>>
    %cst = arith.constant 2.000000e+00 : f32
    %33 = arith.mulf %cst, %32 : f32
    %c1_17 = arith.constant 1 : index
    %34 = memref.load %arg5[%c1_17] : memref<4xf32, #tpu.memory_space<smem>>
    %cst_18 = arith.constant 2.000000e+00 : f32
    %35 = arith.mulf %cst_18, %34 : f32
    %c2_19 = arith.constant 2 : index
    %36 = memref.load %arg5[%c2_19] : memref<4xf32, #tpu.memory_space<smem>>
    %cst_20 = arith.constant 2.000000e+00 : f32
    %37 = arith.mulf %cst_20, %36 : f32
    %c3_21 = arith.constant 3 : index
    %38 = memref.load %arg5[%c3_21] : memref<4xf32, #tpu.memory_space<smem>>
    %cst_22 = arith.constant 2.000000e+00 : f32
    %39 = arith.mulf %cst_22, %38 : f32
    %c0_i32 = arith.constant 0 : i32
    %c8_i32 = arith.constant 8 : i32
    %40 = arith.muli %c0_i32, %c8_i32 : i32
    %41 = tpu.assume_multiple %40, 8 : i32
    %c0_23 = arith.constant 0 : index
    %42 = arith.index_cast %41 : i32 to index
    %c0_24 = arith.constant 0 : index
    %43 = vector.load %arg1[%c0_23, %42, %c0_24] : memref<6x8x128xf32, #tpu.memory_space<vmem>>, vector<1x8x128xf32>
    %44 = vector.shape_cast %43 : vector<1x8x128xf32> to vector<8x128xf32>
    %c1_25 = arith.constant 1 : index
    %45 = arith.index_cast %41 : i32 to index
    %c0_26 = arith.constant 0 : index
    %46 = vector.load %arg1[%c1_25, %45, %c0_26] : memref<6x8x128xf32, #tpu.memory_space<vmem>>, vector<1x8x128xf32>
    %47 = vector.shape_cast %46 : vector<1x8x128xf32> to vector<8x128xf32>
    %c2_27 = arith.constant 2 : index
    %48 = arith.index_cast %41 : i32 to index
    %c0_28 = arith.constant 0 : index
    %49 = vector.load %arg1[%c2_27, %48, %c0_28] : memref<6x8x128xf32, #tpu.memory_space<vmem>>, vector<1x8x128xf32>
    %50 = vector.shape_cast %49 : vector<1x8x128xf32> to vector<8x128xf32>
    %c3_29 = arith.constant 3 : index
    %51 = arith.index_cast %41 : i32 to index
    %c0_30 = arith.constant 0 : index
    %52 = vector.load %arg1[%c3_29, %51, %c0_30] : memref<6x8x128xf32, #tpu.memory_space<vmem>>, vector<1x8x128xf32>
    %53 = vector.shape_cast %52 : vector<1x8x128xf32> to vector<8x128xf32>
    %c4_31 = arith.constant 4 : index
    %54 = arith.index_cast %41 : i32 to index
    %c0_32 = arith.constant 0 : index
    %55 = vector.load %arg1[%c4_31, %54, %c0_32] : memref<6x8x128xf32, #tpu.memory_space<vmem>>, vector<1x8x128xf32>
    %56 = vector.shape_cast %55 : vector<1x8x128xf32> to vector<8x128xf32>
    %c5_33 = arith.constant 5 : index
    %57 = arith.index_cast %41 : i32 to index
    %c0_34 = arith.constant 0 : index
    %58 = vector.load %arg1[%c5_33, %57, %c0_34] : memref<6x8x128xf32, #tpu.memory_space<vmem>>, vector<1x8x128xf32>
    %59 = vector.shape_cast %58 : vector<1x8x128xf32> to vector<8x128xf32>
    %60 = vector.broadcast %0 : f32 to vector<8x128xf32>
    %61 = arith.mulf %44, %60 : vector<8x128xf32>
    %62 = vector.broadcast %4 : f32 to vector<8x128xf32>
    %63 = arith.mulf %47, %62 : vector<8x128xf32>
    %64 = arith.addf %61, %63 : vector<8x128xf32>
    %65 = vector.broadcast %8 : f32 to vector<8x128xf32>
    %66 = arith.mulf %50, %65 : vector<8x128xf32>
    %67 = arith.addf %64, %66 : vector<8x128xf32>
    %68 = vector.broadcast %12 : f32 to vector<8x128xf32>
    %69 = arith.addf %67, %68 : vector<8x128xf32>
    %cst_35 = arith.constant 0.000000e+00 : f32
    %70 = vector.broadcast %cst_35 : f32 to vector<8x128xf32>
    %71 = arith.maximumf %69, %70 : vector<8x128xf32>
    %72 = vector.broadcast %0 : f32 to vector<8x128xf32>
    %73 = arith.mulf %53, %72 : vector<8x128xf32>
    %74 = vector.broadcast %4 : f32 to vector<8x128xf32>
    %75 = arith.mulf %56, %74 : vector<8x128xf32>
    %76 = arith.addf %73, %75 : vector<8x128xf32>
    %77 = vector.broadcast %8 : f32 to vector<8x128xf32>
    %78 = arith.mulf %59, %77 : vector<8x128xf32>
    %79 = arith.addf %76, %78 : vector<8x128xf32>
    %80 = vector.broadcast %12 : f32 to vector<8x128xf32>
    %81 = arith.addf %79, %80 : vector<8x128xf32>
    %cst_36 = arith.constant 0.000000e+00 : f32
    %82 = vector.broadcast %cst_36 : f32 to vector<8x128xf32>
    %83 = arith.maximumf %81, %82 : vector<8x128xf32>
    %84 = arith.addf %71, %83 : vector<8x128xf32>
    %85 = vector.broadcast %1 : f32 to vector<8x128xf32>
    %86 = arith.mulf %44, %85 : vector<8x128xf32>
    %87 = vector.broadcast %5 : f32 to vector<8x128xf32>
    %88 = arith.mulf %47, %87 : vector<8x128xf32>
    %89 = arith.addf %86, %88 : vector<8x128xf32>
    %90 = vector.broadcast %9 : f32 to vector<8x128xf32>
    %91 = arith.mulf %50, %90 : vector<8x128xf32>
    %92 = arith.addf %89, %91 : vector<8x128xf32>
    %93 = vector.broadcast %13 : f32 to vector<8x128xf32>
    %94 = arith.addf %92, %93 : vector<8x128xf32>
    %cst_37 = arith.constant 0.000000e+00 : f32
    %95 = vector.broadcast %cst_37 : f32 to vector<8x128xf32>
    %96 = arith.maximumf %94, %95 : vector<8x128xf32>
    %97 = vector.broadcast %1 : f32 to vector<8x128xf32>
    %98 = arith.mulf %53, %97 : vector<8x128xf32>
    %99 = vector.broadcast %5 : f32 to vector<8x128xf32>
    %100 = arith.mulf %56, %99 : vector<8x128xf32>
    %101 = arith.addf %98, %100 : vector<8x128xf32>
    %102 = vector.broadcast %9 : f32 to vector<8x128xf32>
    %103 = arith.mulf %59, %102 : vector<8x128xf32>
    %104 = arith.addf %101, %103 : vector<8x128xf32>
    %105 = vector.broadcast %13 : f32 to vector<8x128xf32>
    %106 = arith.addf %104, %105 : vector<8x128xf32>
    %cst_38 = arith.constant 0.000000e+00 : f32
    %107 = vector.broadcast %cst_38 : f32 to vector<8x128xf32>
    %108 = arith.maximumf %106, %107 : vector<8x128xf32>
    %109 = arith.addf %96, %108 : vector<8x128xf32>
    %110 = vector.broadcast %2 : f32 to vector<8x128xf32>
    %111 = arith.mulf %44, %110 : vector<8x128xf32>
    %112 = vector.broadcast %6 : f32 to vector<8x128xf32>
    %113 = arith.mulf %47, %112 : vector<8x128xf32>
    %114 = arith.addf %111, %113 : vector<8x128xf32>
    %115 = vector.broadcast %10 : f32 to vector<8x128xf32>
    %116 = arith.mulf %50, %115 : vector<8x128xf32>
    %117 = arith.addf %114, %116 : vector<8x128xf32>
    %118 = vector.broadcast %14 : f32 to vector<8x128xf32>
    %119 = arith.addf %117, %118 : vector<8x128xf32>
    %cst_39 = arith.constant 0.000000e+00 : f32
    %120 = vector.broadcast %cst_39 : f32 to vector<8x128xf32>
    %121 = arith.maximumf %119, %120 : vector<8x128xf32>
    %122 = vector.broadcast %2 : f32 to vector<8x128xf32>
    %123 = arith.mulf %53, %122 : vector<8x128xf32>
    %124 = vector.broadcast %6 : f32 to vector<8x128xf32>
    %125 = arith.mulf %56, %124 : vector<8x128xf32>
    %126 = arith.addf %123, %125 : vector<8x128xf32>
    %127 = vector.broadcast %10 : f32 to vector<8x128xf32>
    %128 = arith.mulf %59, %127 : vector<8x128xf32>
    %129 = arith.addf %126, %128 : vector<8x128xf32>
    %130 = vector.broadcast %14 : f32 to vector<8x128xf32>
    %131 = arith.addf %129, %130 : vector<8x128xf32>
    %cst_40 = arith.constant 0.000000e+00 : f32
    %132 = vector.broadcast %cst_40 : f32 to vector<8x128xf32>
    %133 = arith.maximumf %131, %132 : vector<8x128xf32>
    %134 = arith.addf %121, %133 : vector<8x128xf32>
    %135 = vector.broadcast %3 : f32 to vector<8x128xf32>
    %136 = arith.mulf %44, %135 : vector<8x128xf32>
    %137 = vector.broadcast %7 : f32 to vector<8x128xf32>
    %138 = arith.mulf %47, %137 : vector<8x128xf32>
    %139 = arith.addf %136, %138 : vector<8x128xf32>
    %140 = vector.broadcast %11 : f32 to vector<8x128xf32>
    %141 = arith.mulf %50, %140 : vector<8x128xf32>
    %142 = arith.addf %139, %141 : vector<8x128xf32>
    %143 = vector.broadcast %15 : f32 to vector<8x128xf32>
    %144 = arith.addf %142, %143 : vector<8x128xf32>
    %cst_41 = arith.constant 0.000000e+00 : f32
    %145 = vector.broadcast %cst_41 : f32 to vector<8x128xf32>
    %146 = arith.maximumf %144, %145 : vector<8x128xf32>
    %147 = vector.broadcast %3 : f32 to vector<8x128xf32>
    %148 = arith.mulf %53, %147 : vector<8x128xf32>
    %149 = vector.broadcast %7 : f32 to vector<8x128xf32>
    %150 = arith.mulf %56, %149 : vector<8x128xf32>
    %151 = arith.addf %148, %150 : vector<8x128xf32>
    %152 = vector.broadcast %11 : f32 to vector<8x128xf32>
    %153 = arith.mulf %59, %152 : vector<8x128xf32>
    %154 = arith.addf %151, %153 : vector<8x128xf32>
    %155 = vector.broadcast %15 : f32 to vector<8x128xf32>
    %156 = arith.addf %154, %155 : vector<8x128xf32>
    %cst_42 = arith.constant 0.000000e+00 : f32
    %157 = vector.broadcast %cst_42 : f32 to vector<8x128xf32>
    %158 = arith.maximumf %156, %157 : vector<8x128xf32>
    %159 = arith.addf %146, %158 : vector<8x128xf32>
    %160 = vector.broadcast %16 : f32 to vector<8x128xf32>
    %161 = arith.mulf %84, %160 : vector<8x128xf32>
    %162 = vector.broadcast %20 : f32 to vector<8x128xf32>
    %163 = arith.mulf %109, %162 : vector<8x128xf32>
    %164 = arith.addf %161, %163 : vector<8x128xf32>
    %165 = vector.broadcast %24 : f32 to vector<8x128xf32>
    %166 = arith.mulf %134, %165 : vector<8x128xf32>
    %167 = arith.addf %164, %166 : vector<8x128xf32>
    %168 = vector.broadcast %28 : f32 to vector<8x128xf32>
    %169 = arith.mulf %159, %168 : vector<8x128xf32>
    %170 = arith.addf %167, %169 : vector<8x128xf32>
    %171 = vector.broadcast %33 : f32 to vector<8x128xf32>
    %172 = arith.addf %170, %171 : vector<8x128xf32>
    %c0_43 = arith.constant 0 : index
    %173 = arith.index_cast %41 : i32 to index
    %c0_44 = arith.constant 0 : index
    %174 = vector.load %arg6[%c0_43, %173, %c0_44] : memref<4x8x128xf32, #tpu.memory_space<vmem>>, vector<1x8x128xf32>
    %175 = vector.shape_cast %174 : vector<1x8x128xf32> to vector<8x128xf32>
    %176 = vector.shape_cast %172 : vector<8x128xf32> to vector<1x8x128xf32>
    tpu.vector_store %arg6[%c0_43, %173, %c0_44], %176 {strides = array<i32>} : memref<4x8x128xf32, #tpu.memory_space<vmem>>, vector<1x8x128xf32>,
    %177 = vector.broadcast %17 : f32 to vector<8x128xf32>
    %178 = arith.mulf %84, %177 : vector<8x128xf32>
    %179 = vector.broadcast %21 : f32 to vector<8x128xf32>
    %180 = arith.mulf %109, %179 : vector<8x128xf32>
    %181 = arith.addf %178, %180 : vector<8x128xf32>
    %182 = vector.broadcast %25 : f32 to vector<8x128xf32>
    %183 = arith.mulf %134, %182 : vector<8x128xf32>
    %184 = arith.addf %181, %183 : vector<8x128xf32>
    %185 = vector.broadcast %29 : f32 to vector<8x128xf32>
    %186 = arith.mulf %159, %185 : vector<8x128xf32>
    %187 = arith.addf %184, %186 : vector<8x128xf32>
    %188 = vector.broadcast %35 : f32 to vector<8x128xf32>
    %189 = arith.addf %187, %188 : vector<8x128xf32>
    %c1_45 = arith.constant 1 : index
    %190 = arith.index_cast %41 : i32 to index
    %c0_46 = arith.constant 0 : index
    %191 = vector.load %arg6[%c1_45, %190, %c0_46] : memref<4x8x128xf32, #tpu.memory_space<vmem>>, vector<1x8x128xf32>
    %192 = vector.shape_cast %191 : vector<1x8x128xf32> to vector<8x128xf32>
    %193 = vector.shape_cast %189 : vector<8x128xf32> to vector<1x8x128xf32>
    tpu.vector_store %arg6[%c1_45, %190, %c0_46], %193 {strides = array<i32>} : memref<4x8x128xf32, #tpu.memory_space<vmem>>, vector<1x8x128xf32>,
    %194 = vector.broadcast %18 : f32 to vector<8x128xf32>
    %195 = arith.mulf %84, %194 : vector<8x128xf32>
    %196 = vector.broadcast %22 : f32 to vector<8x128xf32>
    %197 = arith.mulf %109, %196 : vector<8x128xf32>
    %198 = arith.addf %195, %197 : vector<8x128xf32>
    %199 = vector.broadcast %26 : f32 to vector<8x128xf32>
    %200 = arith.mulf %134, %199 : vector<8x128xf32>
    %201 = arith.addf %198, %200 : vector<8x128xf32>
    %202 = vector.broadcast %30 : f32 to vector<8x128xf32>
    %203 = arith.mulf %159, %202 : vector<8x128xf32>
    %204 = arith.addf %201, %203 : vector<8x128xf32>
    %205 = vector.broadcast %37 : f32 to vector<8x128xf32>
    %206 = arith.addf %204, %205 : vector<8x128xf32>
    %c2_47 = arith.constant 2 : index
    %207 = arith.index_cast %41 : i32 to index
    %c0_48 = arith.constant 0 : index
    %208 = vector.load %arg6[%c2_47, %207, %c0_48] : memref<4x8x128xf32, #tpu.memory_space<vmem>>, vector<1x8x128xf32>
    %209 = vector.shape_cast %208 : vector<1x8x128xf32> to vector<8x128xf32>
    %210 = vector.shape_cast %206 : vector<8x128xf32> to vector<1x8x128xf32>
    tpu.vector_store %arg6[%c2_47, %207, %c0_48], %210 {strides = array<i32>} : memref<4x8x128xf32, #tpu.memory_space<vmem>>, vector<1x8x128xf32>,
    %211 = vector.broadcast %19 : f32 to vector<8x128xf32>
    %212 = arith.mulf %84, %211 : vector<8x128xf32>
    %213 = vector.broadcast %23 : f32 to vector<8x128xf32>
    %214 = arith.mulf %109, %213 : vector<8x128xf32>
    %215 = arith.addf %212, %214 : vector<8x128xf32>
    %216 = vector.broadcast %27 : f32 to vector<8x128xf32>
    %217 = arith.mulf %134, %216 : vector<8x128xf32>
    %218 = arith.addf %215, %217 : vector<8x128xf32>
    %219 = vector.broadcast %31 : f32 to vector<8x128xf32>
    %220 = arith.mulf %159, %219 : vector<8x128xf32>
    %221 = arith.addf %218, %220 : vector<8x128xf32>
    %222 = vector.broadcast %39 : f32 to vector<8x128xf32>
    %223 = arith.addf %221, %222 : vector<8x128xf32>
    %c3_49 = arith.constant 3 : index
    %224 = arith.index_cast %41 : i32 to index
    %c0_50 = arith.constant 0 : index
    %225 = vector.load %arg6[%c3_49, %224, %c0_50] : memref<4x8x128xf32, #tpu.memory_space<vmem>>, vector<1x8x128xf32>
    %226 = vector.shape_cast %225 : vector<1x8x128xf32> to vector<8x128xf32>
    %227 = vector.shape_cast %223 : vector<8x128xf32> to vector<1x8x128xf32>
    tpu.vector_store %arg6[%c3_49, %224, %c0_50], %227 {strides = array<i32>} : memref<4x8x128xf32, #tpu.memory_space<vmem>>, vector<1x8x128xf32>,
    %c1_i32 = arith.constant 1 : i32
    return
  }
  func.func @transform_0(%arg0: i32) -> (i32, i32, i32) {
    %c0_i32 = arith.constant 0 : i32
    %c0_i32_0 = arith.constant 0 : i32
    %c0_i32_1 = arith.constant 0 : i32
    return %c0_i32, %arg0, %c0_i32_0 : i32, i32, i32
  }
  func.func @transform_1(%arg0: i32) -> i32 {
    %c0_i32 = arith.constant 0 : i32
    %c0_i32_0 = arith.constant 0 : i32
    return %c0_i32 : i32
  }
  func.func @transform_2(%arg0: i32) -> i32 {
    %c0_i32 = arith.constant 0 : i32
    %c0_i32_0 = arith.constant 0 : i32
    return %c0_i32 : i32
  }
  func.func @transform_3(%arg0: i32) -> i32 {
    %c0_i32 = arith.constant 0 : i32
    %c0_i32_0 = arith.constant 0 : i32
    return %c0_i32 : i32
  }
  func.func @transform_4(%arg0: i32) -> i32 {
    %c0_i32 = arith.constant 0 : i32
    %c0_i32_0 = arith.constant 0 : i32
    return %c0_i32 : i32
  }
  func.func @transform_5(%arg0: i32) -> (i32, i32, i32) {
    %c0_i32 = arith.constant 0 : i32
    %c0_i32_0 = arith.constant 0 : i32
    %c0_i32_1 = arith.constant 0 : i32
    return %c0_i32, %arg0, %c0_i32_0 : i32, i32, i32
  }
}

</mosaic_0001>

<llo_original>
// kernel: position_encoder_forward.1
$region0: #{position_encoder_forward.1}
  #allocation0 [shape = 'u32[]', space=smem, size = 0x4, offset = 0x4, fixed_abs, tag = 'smem constant byte address 0x4 - core index']
  #allocation1 [shape = 'u32[72,128]{1,0:T(1,128)}', space=vmem, size = 0x9000, scoped, tag = 'internal scratch']
  %s0 = inlined_call_operand.vmem [shape: f32[6,8,128], index: 0, kind: input, shape index: {}]
  %s1 = inlined_call_operand.vmem [shape: f32[12], index: 1, kind: input, shape index: {}]
  %s2 = inlined_call_operand.vmem [shape: f32[4], index: 2, kind: input, shape index: {}]
  %s3 = inlined_call_operand.vmem [shape: f32[16], index: 3, kind: input, shape index: {}]
  %s4 = inlined_call_operand.vmem [shape: f32[4], index: 4, kind: input, shape index: {}]
  %s5 = inlined_call_operand.vmem [shape: f32[4,8,128], index: 5, kind: output, shape index: {}]
  %s6 = sld [smem:[#allocation0]]
  $region46: #{position_encoder_forward.1} parent=0
    _
  %s8 = ssub.s32 1, %s6
  %s9 = scalar_select 0, %s8, %s6
  $region1: #{position_encoder_forward.1} parent=0
    #allocation2 [shape = 'u8[512]{0}', space=smem, size = 0x200, scoped, tag = 'input window, operand 1, single buffered']
    #allocation3 [shape = 's32[1]{0}', space=sflag, size = 0x4, scoped, tag = 'scoped memory for position_encoder_forward.1']
    #allocation4 [shape = 'u8[512]{0}', space=smem, size = 0x200, scoped, tag = 'input window, operand 2, single buffered']
    #allocation5 [shape = 's32[1]{0}', space=sflag, size = 0x4, scoped, tag = 'scoped memory for position_encoder_forward.1']
    #allocation6 [shape = 'u8[512]{0}', space=smem, size = 0x200, scoped, tag = 'input window, operand 3, single buffered']
    #allocation7 [shape = 'u8[512]{0}', space=smem, size = 0x200, scoped, tag = 'input window, operand 4, single buffered']
    #allocation8 [shape = 's32[1]{0}', space=sflag, size = 0x4, scoped, tag = 'scoped memory for position_encoder_forward.1']
    %10 = vsyncpa [#allocation3], 0
    %11 = vsyncpa [#allocation5], 0
    %12 = vsyncpa [#allocation8], 0
    // Predicated region
    $region2: #{position_encoder_forward.1} parent=1 // pred_check
      _
    $region3: #{position_encoder_forward.1} parent=1 // pred_check_branch
      %14 = sbr.rel (0) target = $region5
    $region4: #{position_encoder_forward.1} parent=1 // pred_region
      _
    $region5: #{position_encoder_forward.1} parent=1 // pred_fallthru
      _
    // Predicated region
    $region6: #{position_encoder_forward.1} parent=1 // pred_check
      _
    $region7: #{position_encoder_forward.1} parent=1 // pred_check_branch
      %16 = sbr.rel (0) target = $region9
    $region8: #{position_encoder_forward.1} parent=1 // pred_region
      %18 = vsyncadd [#allocation3], 0
      %s20 = sshll.u32 %s1, 4
      %s21 = int_to_ptr.vmem [resolvable:$true] %s20
      %23 = dma.vmem_to_smem %s21, 16, [#allocation2], [#allocation3]
    $region9: #{position_encoder_forward.1} parent=1 // pred_fallthru
      _
    // Predicated region
    $region10: #{position_encoder_forward.1} parent=1 // pred_check
      _
    $region11: #{position_encoder_forward.1} parent=1 // pred_check_branch
      %25 = sbr.rel (0) target = $region13
    $region12: #{position_encoder_forward.1} parent=1 // pred_region
      %27 = vsyncadd [#allocation5], 0
      %s29 = sshll.u32 %s2, 4
      %s30 = int_to_ptr.vmem [resolvable:$true] %s29
      %32 = dma.vmem_to_smem %s30, 16, [#allocation4], [#allocation5]
    $region13: #{position_encoder_forward.1} parent=1 // pred_fallthru
      _
    // Predicated region
    $region14: #{position_encoder_forward.1} parent=1 // pred_check
      _
    $region15: #{position_encoder_forward.1} parent=1 // pred_check_branch
      %34 = sbr.rel (0) target = $region17
    $region16: #{position_encoder_forward.1} parent=1 // pred_region
      %36 = vsyncadd [#allocation5], 0
      %s38 = sshll.u32 %s3, 4
      %s39 = int_to_ptr.vmem [resolvable:$true] %s38
      %41 = dma.vmem_to_smem %s39, 16, [#allocation6], [#allocation5]
    $region17: #{position_encoder_forward.1} parent=1 // pred_fallthru
      _
    // Predicated region
    $region18: #{position_encoder_forward.1} parent=1 // pred_check
      _
    $region19: #{position_encoder_forward.1} parent=1 // pred_check_branch
      %43 = sbr.rel (0) target = $region21
    $region20: #{position_encoder_forward.1} parent=1 // pred_region
      %45 = vsyncadd [#allocation8], 0
      %s47 = sshll.u32 %s4, 4
      %s48 = int_to_ptr.vmem [resolvable:$true] %s47
      %50 = dma.vmem_to_smem %s48, 16, [#allocation7], [#allocation8]
    $region21: #{position_encoder_forward.1} parent=1 // pred_fallthru
      _
    // Predicated region
    $region22: #{position_encoder_forward.1} parent=1 // pred_check
      _
    $region23: #{position_encoder_forward.1} parent=1 // pred_check_branch
      %52 = sbr.rel (0) target = $region25
    $region24: #{position_encoder_forward.1} parent=1 // pred_region
      %54 = dma.done [#allocation3], 16
    $region25: #{position_encoder_forward.1} parent=1 // pred_fallthru
      _
    // Predicated region
    $region26: #{position_encoder_forward.1} parent=1 // pred_check
      _
    $region27: #{position_encoder_forward.1} parent=1 // pred_check_branch
      %56 = sbr.rel (0) target = $region29
    $region28: #{position_encoder_forward.1} parent=1 // pred_region
      %58 = dma.done [#allocation5], 16
    $region29: #{position_encoder_forward.1} parent=1 // pred_fallthru
      _
    // Predicated region
    $region30: #{position_encoder_forward.1} parent=1 // pred_check
      _
    $region31: #{position_encoder_forward.1} parent=1 // pred_check_branch
      %60 = sbr.rel (0) target = $region33
    $region32: #{position_encoder_forward.1} parent=1 // pred_region
      %62 = dma.done [#allocation5], 16
    $region33: #{position_encoder_forward.1} parent=1 // pred_fallthru
      _
    // Predicated region
    $region34: #{position_encoder_forward.1} parent=1 // pred_check
      _
    $region35: #{position_encoder_forward.1} parent=1 // pred_check_branch
      %64 = sbr.rel (0) target = $region37
    $region36: #{position_encoder_forward.1} parent=1 // pred_region
      %66 = dma.done [#allocation8], 16
    $region37: #{position_encoder_forward.1} parent=1 // pred_fallthru
      _
    %67 = sfence
    %s68 = sld [smem:[#allocation2]]
    %s69 = sld [smem:[#allocation2 + $0x1]]
    %s70 = sld [smem:[#allocation2 + $0x2]]
    %s71 = sld [smem:[#allocation2 + $0x3]]
    %s72 = sld [smem:[#allocation2 + $0x4]]
    %s73 = sld [smem:[#allocation2 + $0x5]]
    %s74 = sld [smem:[#allocation2 + $0x6]]
    %s75 = sld [smem:[#allocation2 + $0x7]]
    %s76 = sld [smem:[#allocation2 + $0x8]]
    %s77 = sld [smem:[#allocation2 + $0x9]]
    %s78 = sld [smem:[#allocation2 + $0xa]]
    %s79 = sld [smem:[#allocation2 + $0xb]]
    %s80 = sld [smem:[#allocation4]]
    %s81 = sld [smem:[#allocation4 + $0x1]]
    %s82 = sld [smem:[#allocation4 + $0x2]]
    %s83 = sld [smem:[#allocation4 + $0x3]]
    %s84 = sld [smem:[#allocation6]]
    %s85 = sld [smem:[#allocation6 + $0x1]]
    %s86 = sld [smem:[#allocation6 + $0x2]]
    %s87 = sld [smem:[#allocation6 + $0x3]]
    %s88 = sld [smem:[#allocation6 + $0x4]]
    %s89 = sld [smem:[#allocation6 + $0x5]]
    %s90 = sld [smem:[#allocation6 + $0x6]]
    %s91 = sld [smem:[#allocation6 + $0x7]]
    %s92 = sld [smem:[#allocation6 + $0x8]]
    %s93 = sld [smem:[#allocation6 + $0x9]]
    %s94 = sld [smem:[#allocation6 + $0xa]]
    %s95 = sld [smem:[#allocation6 + $0xb]]
    %s96 = sld [smem:[#allocation6 + $0xc]]
    %s97 = sld [smem:[#allocation6 + $0xd]]
    %s98 = sld [smem:[#allocation6 + $0xe]]
    %s99 = sld [smem:[#allocation6 + $0xf]]
    %s100 = sld [smem:[#allocation7]]
    %s101 = smul.f32 %s100, 2.0
    %s102 = sld [smem:[#allocation7 + $0x1]]
    %s103 = smul.f32 %s102, 2.0
    %s104 = sld [smem:[#allocation7 + $0x2]]
    %s105 = smul.f32 %s104, 2.0
    %s106 = sld [smem:[#allocation7 + $0x3]]
    %s107 = smul.f32 %s106, 2.0
    %v108 = vld [vmem:[%s0] sm:$0xff]
    %s109 = sadd.s32 0, 8
    %s110 = scalar_lea.vmem %s0, %s109
    %v111 = vld [vmem:[%s110] sm:$0xff]
    %s112 = sadd.s32 0, 16
    %s113 = scalar_lea.vmem %s0, %s112
    %v114 = vld [vmem:[%s113] sm:$0xff]
    %s115 = sadd.s32 0, 24
    %s116 = scalar_lea.vmem %s0, %s115
    %v117 = vld [vmem:[%s116] sm:$0xff]
    %s118 = sadd.s32 0, 32
    %s119 = scalar_lea.vmem %s0, %s118
    %v120 = vld [vmem:[%s119] sm:$0xff]
    %s121 = sadd.s32 0, 40
    %s122 = scalar_lea.vmem %s0, %s121
    %v123 = vld [vmem:[%s122] sm:$0xff]
    %v124 = vstv %s68
    %v125 = vmul.f32 %v108, %v124
    %v126 = vstv %s72
    %v127 = vmul.f32 %v111, %v126
    %v128 = vadd.f32 %v125, %v127
    %v129 = vstv %s76
    %v130 = vmul.f32 %v114, %v129
    %v131 = vadd.f32 %v128, %v130
    %v132 = vstv %s80
    %v133 = vadd.f32 %v131, %v132
    %v134 = vmax.f32 %v133, 0.0
    %v135 = vmul.f32 %v117, %v124
    %v136 = vmul.f32 %v120, %v126
    %v137 = vadd.f32 %v135, %v136
    %v138 = vmul.f32 %v123, %v129
    %v139 = vadd.f32 %v137, %v138
    %v140 = vadd.f32 %v139, %v132
    %v141 = vmax.f32 %v140, 0.0
    %v142 = vadd.f32 %v134, %v141
    %v143 = vstv %s69
    %v144 = vmul.f32 %v108, %v143
    %v145 = vstv %s73
    %v146 = vmul.f32 %v111, %v145
    %v147 = vadd.f32 %v144, %v146
    %v148 = vstv %s77
    %v149 = vmul.f32 %v114, %v148
    %v150 = vadd.f32 %v147, %v149
    %v151 = vstv %s81
    %v152 = vadd.f32 %v150, %v151
    %v153 = vmax.f32 %v152, 0.0
    %v154 = vmul.f32 %v117, %v143
    %v155 = vmul.f32 %v120, %v145
    %v156 = vadd.f32 %v154, %v155
    %v157 = vmul.f32 %v123, %v148
    %v158 = vadd.f32 %v156, %v157
    %v159 = vadd.f32 %v158, %v151
    %v160 = vmax.f32 %v159, 0.0
    %v161 = vadd.f32 %v153, %v160
    %v162 = vstv %s70
    %v163 = vmul.f32 %v108, %v162
    %v164 = vstv %s74
    %v165 = vmul.f32 %v111, %v164
    %v166 = vadd.f32 %v163, %v165
    %v167 = vstv %s78
    %v168 = vmul.f32 %v114, %v167
    %v169 = vadd.f32 %v166, %v168
    %v170 = vstv %s82
    %v171 = vadd.f32 %v169, %v170
    %v172 = vmax.f32 %v171, 0.0
    %v173 = vmul.f32 %v117, %v162
    %v174 = vmul.f32 %v120, %v164
    %v175 = vadd.f32 %v173, %v174
    %v176 = vmul.f32 %v123, %v167
    %v177 = vadd.f32 %v175, %v176
    %v178 = vadd.f32 %v177, %v170
    %v179 = vmax.f32 %v178, 0.0
    %v180 = vadd.f32 %v172, %v179
    %v181 = vstv %s71
    %v182 = vmul.f32 %v108, %v181
    %v183 = vstv %s75
    %v184 = vmul.f32 %v111, %v183
    %v185 = vadd.f32 %v182, %v184
    %v186 = vstv %s79
    %v187 = vmul.f32 %v114, %v186
    %v188 = vadd.f32 %v185, %v187
    %v189 = vstv %s83
    %v190 = vadd.f32 %v188, %v189
    %v191 = vmax.f32 %v190, 0.0
    %v192 = vmul.f32 %v117, %v181
    %v193 = vmul.f32 %v120, %v183
    %v194 = vadd.f32 %v192, %v193
    %v195 = vmul.f32 %v123, %v186
    %v196 = vadd.f32 %v194, %v195
    %v197 = vadd.f32 %v196, %v189
    %v198 = vmax.f32 %v197, 0.0
    %v199 = vadd.f32 %v191, %v198
    %v200 = vstv %s84
    %v201 = vmul.f32 %v142, %v200
    %v202 = vstv %s88
    %v203 = vmul.f32 %v161, %v202
    %v204 = vadd.f32 %v201, %v203
    %v205 = vstv %s92
    %v206 = vmul.f32 %v180, %v205
    %v207 = vadd.f32 %v204, %v206
    %v208 = vstv %s96
    %v209 = vmul.f32 %v199, %v208
    %v210 = vadd.f32 %v207, %v209
    %v211 = vstv %s101
    %v212 = vadd.f32 %v210, %v211
    %213 = vst [vmem:[%s5] sm:$0xff] %v212
    %v214 = vstv %s85
    %v215 = vmul.f32 %v142, %v214
    %v216 = vstv %s89
    %v217 = vmul.f32 %v161, %v216
    %v218 = vadd.f32 %v215, %v217
    %v219 = vstv %s93
    %v220 = vmul.f32 %v180, %v219
    %v221 = vadd.f32 %v218, %v220
    %v222 = vstv %s97
    %v223 = vmul.f32 %v199, %v222
    %v224 = vadd.f32 %v221, %v223
    %v225 = vstv %s103
    %v226 = vadd.f32 %v224, %v225
    %s227 = scalar_lea.vmem %s5, %s109
    %228 = vst [vmem:[%s227] sm:$0xff] %v226
    %v229 = vstv %s86
    %v230 = vmul.f32 %v142, %v229
    %v231 = vstv %s90
    %v232 = vmul.f32 %v161, %v231
    %v233 = vadd.f32 %v230, %v232
    %v234 = vstv %s94
    %v235 = vmul.f32 %v180, %v234
    %v236 = vadd.f32 %v233, %v235
    %v237 = vstv %s98
    %v238 = vmul.f32 %v199, %v237
    %v239 = vadd.f32 %v236, %v238
    %v240 = vstv %s105
    %v241 = vadd.f32 %v239, %v240
    %s242 = scalar_lea.vmem %s5, %s112
    %243 = vst [vmem:[%s242] sm:$0xff] %v241
    %v244 = vstv %s87
    %v245 = vmul.f32 %v142, %v244
    %v246 = vstv %s91
    %v247 = vmul.f32 %v161, %v246
    %v248 = vadd.f32 %v245, %v247
    %v249 = vstv %s95
    %v250 = vmul.f32 %v180, %v249
    %v251 = vadd.f32 %v248, %v250
    %v252 = vstv %s99
    %v253 = vmul.f32 %v199, %v252
    %v254 = vadd.f32 %v251, %v253
    %v255 = vstv %s107
    %v256 = vadd.f32 %v254, %v255
    %s257 = scalar_lea.vmem %s5, %s115
    %258 = vst [vmem:[%s257] sm:$0xff] %v256
    // Predicated region
    $region38: #{position_encoder_forward.1} parent=1 // pred_check
      _
    $region39: #{position_encoder_forward.1} parent=1 // pred_check_branch
      %260 = sbr.rel (0) target = $region41
    $region40: #{position_encoder_forward.1} parent=1 // pred_region
      _
    $region41: #{position_encoder_forward.1} parent=1 // pred_fallthru
      _
    // Predicated region
    $region42: #{position_encoder_forward.1} parent=1 // pred_check
      _
    $region43: #{position_encoder_forward.1} parent=1 // pred_check_branch
      %262 = sbr.rel (0) target = $region45
    $region44: #{position_encoder_forward.1} parent=1 // pred_region
      _
    $region45: #{position_encoder_forward.1} parent=1 // pred_fallthru
      _
    %263 = vsyncpa [#allocation3], 1
    %264 = vsyncpa [#allocation5], 1
    %265 = vsyncpa [#allocation8], 1

</llo_original>
